<compile_context>
chip_gen: v6e
topology: v6e:2x2x1
jax: 0.10.0
libtpu: 0.0.40
codegen_flags: <defaults>
</compile_context>

<pallas_src>
import functools

import jax
import jax.numpy as jnp
from jax.experimental import pallas as pl
from jax.experimental.pallas import tpu as pltpu


def _round_up(n, m):
    return (n + m - 1) // m * m


# ----------------------------------------------------------------------------
# Kernel: V small bf16 MXU matmuls (+bias row) + cheap f32 epilogue per tile.
# ----------------------------------------------------------------------------
def _simm_kernel(x_ref, w_ref, b_ref, out_ref, *, V, C, L, spec_off):
    f32 = jnp.float32
    tb = x_ref.shape[1]
    inv_v = 1.0 / float(V)

    # MXU: sum_v x_v @ W_v.  The view-sums for comm / label live in shared
    # column groups of W, so the matmul performs those reductions for free.
    acc = jnp.dot(x_ref[0].astype(jnp.bfloat16), w_ref[0],
                  preferred_element_type=f32)
    for v in range(1, V):                       # V is small & static -> unrolled
        acc = acc + jnp.dot(x_ref[v].astype(jnp.bfloat16), w_ref[v],
                            preferred_element_type=f32)
    y = acc + b_ref[...]                        # f32 bias row, broadcast over rows

    # Epilogue (all f32 -- v5e has no bf16 VPU/EUP path).
    comm = y[:, 0:C]                            # already averaged over views
    lab = y[:, C:C + L]                         # final label logits (fully folded)

    sig = jax.nn.sigmoid(y[:, C + L:C + 2 * L])
    for v in range(1, V):
        o = C + L + v * L
        sig = sig + jax.nn.sigmoid(y[:, o:o + L])
    sig = sig * inv_v

    # Per-row L2 orthogonal term: sum_v <spec_v[b], comm[b]>^2
    ortho = None
    for v in range(V):
        o = spec_off + v * C
        d = jnp.sum(y[:, o:o + C] * comm, axis=1, keepdims=True)
        ortho = d * d if ortho is None else ortho + d * d

    # Single full-width lane-dense store (one unmasked DMA, no zero-init pass).
    pad = out_ref.shape[1] - (2 * L + 1)
    out_ref[...] = jnp.concatenate(
        [lab, sig, ortho, jnp.zeros((tb, pad), f32)], axis=1)


# ----------------------------------------------------------------------------
# One-time weight folding / slab packing (call once per parameter update).
# ----------------------------------------------------------------------------
def pack_simm_weights(p):
    """Fold all static weight chains into a [V, D, NP] bf16 slab + f32 bias row.

    Column layout (NP lanes):
      [0:C)                      comm      (shared; per-view rows hold w_vcf_v/V)
      [C:C+L)                    label     (shared; fully folded incl. comm path)
      [C+L : C+L+V*L)            per-view comm-prediction logits (pre-sigmoid)
      [spec_off : spec_off+V*C)  per-view spec features (spec_off 128-aligned)
    """
    f32 = jnp.float32
    V, D, C = p["w_sh"].shape
    L = p["b_pred"].shape[-1]
    spec_off = _round_up(C + L + V * L, 128)
    NP = _round_up(spec_off + V * C, 128)
    inv_v = 1.0 / float(V)
    w_pred_comm = p["w_pred"][V]                                  # comm -> label

    w = jnp.zeros((V, D, NP), f32)
    b = jnp.zeros((1, NP), f32)

    bias_comm = jnp.mean(p["b_sh"][:, 0, :], axis=0) @ p["w_ce"] + p["b_ce"][0]
    bias_lab = p["b_pred"][0] + bias_comm @ w_pred_comm

    for v in range(V):
        w_vcf = p["w_sh"][v] @ p["w_ce"]                          # [D, C]
        b_vcf = p["b_sh"][v, 0] @ p["w_ce"] + p["b_ce"][0]        # [C]
        w_lab = p["w_spec"][v] @ p["w_pred"][v] + (w_vcf @ w_pred_comm) * inv_v
        bias_lab = bias_lab + p["b_spec"][v, 0] @ p["w_pred"][v]
        w_sig = w_vcf @ p["w_cp"]                                 # [D, L]
        b_sig = b_vcf @ p["w_cp"] + p["b_cp"][0]                  # [L]

        w = w.at[v, :, 0:C].set(w_vcf * inv_v)
        w = w.at[v, :, C:C + L].set(w_lab)
        w = w.at[v, :, C + L + v * L:C + L + (v + 1) * L].set(w_sig)
        w = w.at[v, :, spec_off + v * C:spec_off + (v + 1) * C].set(p["w_spec"][v])
        b = b.at[0, C + L + v * L:C + L + (v + 1) * L].set(b_sig)
        b = b.at[0, spec_off + v * C:spec_off + (v + 1) * C].set(p["b_spec"][v, 0])

    b = b.at[0, 0:C].set(bias_comm)
    b = b.at[0, C:C + L].set(bias_lab)
    return w.astype(jnp.bfloat16), b


# ----------------------------------------------------------------------------
# Jitted forward: pallas_call over a 1-D batch grid with resident weights.
# ----------------------------------------------------------------------------
@functools.partial(jax.jit, static_argnames=("C", "L", "is_training", "block_b"))
def simm_forward(x, w_slab, b_slab, *, C, L, is_training=False, block_b=None):
    """x: [V, B, D] float32.  w_slab/b_slab from pack_simm_weights."""
    V, B, D = x.shape
    NP = w_slab.shape[-1]
    spec_off = _round_up(C + L + V * L, 128)
    OUT_W = _round_up(2 * L + 1, 128)

    # Batch tile: whole batch when small; for large B use big tiles (amortize
    # the ~0.35us/step overhead) but keep >= 2 (even) steps so the batch axis
    # shards across both v7x TensorCores.
    if block_b is not None:
        tb = min(block_b, B)
    elif B <= 1024:
        tb = B
    else:
        nsteps = max(2, -(-B // 2048))
        if nsteps % 2:
            nsteps += 1
        tb = _round_up(-(-B // nsteps), 8)
    grid = (pl.cdiv(B, tb),)

    kernel = functools.partial(_simm_kernel, V=V, C=C, L=L, spec_off=spec_off)
    packed = pl.pallas_call(
        kernel,
        out_shape=jax.ShapeDtypeStruct((B, OUT_W), jnp.float32),
        grid_spec=pltpu.PrefetchScalarGridSpec(
            num_scalar_prefetch=0,
            grid=grid,
            in_specs=[
                pl.BlockSpec((V, tb, D), lambda i: (0, i, 0)),   # x tile (pipelined)
                pl.BlockSpec((V, D, NP), lambda i: (0, 0, 0)),   # weights (resident)
                pl.BlockSpec((1, NP), lambda i: (0, 0)),         # bias row (resident)
            ],
            out_specs=pl.BlockSpec((tb, OUT_W), lambda i: (i, 0)),
        ),
        compiler_params=pltpu.CompilerParams(
            dimension_semantics=("parallel",)),
    )(x, w_slab, b_slab)

    label = packed[:, 0:L]
    if is_training:
        ortho = jnp.sum(packed[:, 2 * L]) / (V * B)
        return {"label_predictions": label,
                "orthogonal_regularization": ortho}
    return {"label_predictions": label,
            "comm_label_predictions": packed[:, L:2 * L]}


# ----------------------------------------------------------------------------
# Pure-JAX f32 reference (unfolded math, mirrors the PyTorch module).
# ----------------------------------------------------------------------------
def simm_reference(x, p):
    V, B, D = x.shape
    comm = 0.0
    sig = 0.0
    label = p["b_pred"][0]
    specs = []
    for v in range(V):
        spec = x[v] @ p["w_spec"][v] + p["b_spec"][v, 0]
        shared = x[v] @ p["w_sh"][v] + p["b_sh"][v, 0]
        vcf = shared @ p["w_ce"] + p["b_ce"][0]
        comm = comm + vcf
        sig = sig + jax.nn.sigmoid(vcf @ p["w_cp"] + p["b_cp"][0])
        label = label + spec @ p["w_pred"][v]
        specs.append(spec)
    comm = comm / V
    label = label + comm @ p["w_pred"][V]
    sig = sig / V
    ortho = sum(jnp.sum(jnp.sum(s * comm, axis=1) ** 2) for s in specs) / (B * V)
    return label, sig, ortho


def init_params(key, V, D, C, L):
    ks = jax.random.split(key, 10)
    s = 0.1
    return {
        "w_spec": s * jax.random.normal(ks[0], (V, D, C), jnp.float32),
        "b_spec": s * jax.random.normal(ks[1], (V, 1, C), jnp.float32),
        "w_sh":   s * jax.random.normal(ks[2], (V, D, C), jnp.float32),
        "b_sh":   s * jax.random.normal(ks[3], (V, 1, C), jnp.float32),
        "w_ce":   s * jax.random.normal(ks[4], (C, C), jnp.float32),
        "b_ce":   s * jax.random.normal(ks[5], (1, C), jnp.float32),
        "w_pred": s * jax.random.normal(ks[6], (V + 1, C, L), jnp.float32),
        "b_pred": s * jax.random.normal(ks[7], (1, L), jnp.float32),
        "w_cp":   s * jax.random.normal(ks[8], (C, L), jnp.float32),
        "b_cp":   s * jax.random.normal(ks[9], (1, L), jnp.float32),
    }


if __name__ == "__main__":
    V, B, D, C, L = 3, 8, 32, 32, 8   # views, batch, view dim, comm_feature_num, label_num

    key = jax.random.PRNGKey(0)
    kx, kp, kx2 = jax.random.split(key, 3)
    x = jax.random.normal(kx, (V, B, D), jnp.float32)
    params = init_params(kp, V, D, C, L)

    # Pack / fold weights ONCE (outside the per-forward jit).
    w_slab, b_slab = pack_simm_weights(params)

    # inference path
    infer = simm_forward(x, w_slab, b_slab, C=C, L=L, is_training=False)
    # training path (well-defined parts: label predictions + L2 orthogonal reg)
    train = simm_forward(x, w_slab, b_slab, C=C, L=L, is_training=True)
    jax.block_until_ready(infer)
    jax.block_until_ready(train)

    ref_label, ref_sig, ref_ortho = simm_reference(x, params)
    # bf16 MXU operands over folded weight chains -> ~1e-2 level abs error.
    assert jnp.allclose(infer["label_predictions"], ref_label, atol=3e-2), "label mismatch"
    assert jnp.allclose(infer["comm_label_predictions"], ref_sig, atol=3e-2), "comm pred mismatch"
    assert jnp.allclose(train["label_predictions"], ref_label, atol=3e-2), "train label mismatch"
    assert jnp.allclose(train["orthogonal_regularization"], ref_ortho,
                        atol=5e-2, rtol=5e-2), "ortho mismatch"

    # Ragged / multi-tile batch: B not a multiple of the batch tile.
    B2 = 200
    x2 = jax.random.normal(kx2, (V, B2, D), jnp.float32)
    out2 = simm_forward(x2, w_slab, b_slab, C=C, L=L, is_training=True, block_b=64)
    jax.block_until_ready(out2)
    r_label2, _, r_ortho2 = simm_reference(x2, params)
    assert jnp.allclose(out2["label_predictions"], r_label2, atol=3e-2), "ragged label mismatch"
    assert jnp.allclose(out2["orthogonal_regularization"], r_ortho2,
                        atol=5e-2, rtol=5e-2), "ragged ortho mismatch"

    print("KERNEL_OK")
</pallas_src>

<mosaic_0001>
module attributes {stable_mosaic.version = 11 : i64} {
  func.func @_simm_kernel(%arg0: i32, %arg1: memref<3x8x32xf32, #tpu.memory_space<vmem>>, %arg2: memref<3x32x256xbf16, #tpu.memory_space<vmem>>, %arg3: memref<1x256xf32, #tpu.memory_space<vmem>>, %arg4: memref<8x128xf32, #tpu.memory_space<vmem>>) attributes {dimension_semantics = [#tpu.dimension_semantics<parallel>], iteration_bounds = array<i64: 1>, scalar_prefetch = 0 : i64, scratch_operands = 0 : i64, tpu.core_type = #tpu.core_type<tc>, window_params = [{transform_indices = @transform_0, window_bounds = array<i64: 3, 8, 32>}, {pipeline_mode = #tpu.pipeline_mode<synchronous>, transform_indices = @transform_1, window_bounds = array<i64: 3, 32, 256>}, {pipeline_mode = #tpu.pipeline_mode<synchronous>, transform_indices = @transform_2, window_bounds = array<i64: 1, 256>}, {transform_indices = @transform_3, window_bounds = array<i64: 8, 128>}]} {
    %c0 = arith.constant 0 : index
    %c0_0 = arith.constant 0 : index
    %c0_1 = arith.constant 0 : index
    %0 = vector.load %arg1[%c0, %c0_0, %c0_1] : memref<3x8x32xf32, #tpu.memory_space<vmem>>, vector<1x8x32xf32>
    %1 = vector.shape_cast %0 : vector<1x8x32xf32> to vector<8x32xf32>
    %2 = arith.truncf %1 : vector<8x32xf32> to vector<8x32xbf16>
    %c0_2 = arith.constant 0 : index
    %c0_3 = arith.constant 0 : index
    %c0_4 = arith.constant 0 : index
    %3 = vector.load %arg2[%c0_2, %c0_3, %c0_4] : memref<3x32x256xbf16, #tpu.memory_space<vmem>>, vector<1x32x256xbf16>
    %4 = vector.shape_cast %3 : vector<1x32x256xbf16> to vector<32x256xbf16>
    %cst = arith.constant dense<0.000000e+00> : vector<8x256xf32>
    %5 = tpu.matmul %2, %4, %cst {dimension_numbers = #tpu.dot_dimension_numbers<[1], [0], [0], [1], [0, 0, 1, 1], [], []>} : vector<8x32xbf16>, vector<32x256xbf16>, vector<8x256xf32> -> vector<8x256xf32>
    %c1 = arith.constant 1 : index
    %c0_5 = arith.constant 0 : index
    %c0_6 = arith.constant 0 : index
    %6 = vector.load %arg1[%c1, %c0_5, %c0_6] : memref<3x8x32xf32, #tpu.memory_space<vmem>>, vector<1x8x32xf32>
    %7 = vector.shape_cast %6 : vector<1x8x32xf32> to vector<8x32xf32>
    %8 = arith.truncf %7 : vector<8x32xf32> to vector<8x32xbf16>
    %c1_7 = arith.constant 1 : index
    %c0_8 = arith.constant 0 : index
    %c0_9 = arith.constant 0 : index
    %9 = vector.load %arg2[%c1_7, %c0_8, %c0_9] : memref<3x32x256xbf16, #tpu.memory_space<vmem>>, vector<1x32x256xbf16>
    %10 = vector.shape_cast %9 : vector<1x32x256xbf16> to vector<32x256xbf16>
    %cst_10 = arith.constant dense<0.000000e+00> : vector<8x256xf32>
    %11 = tpu.matmul %8, %10, %cst_10 {dimension_numbers = #tpu.dot_dimension_numbers<[1], [0], [0], [1], [0, 0, 1, 1], [], []>} : vector<8x32xbf16>, vector<32x256xbf16>, vector<8x256xf32> -> vector<8x256xf32>
    %12 = arith.addf %5, %11 : vector<8x256xf32>
    %c2 = arith.constant 2 : index
    %c0_11 = arith.constant 0 : index
    %c0_12 = arith.constant 0 : index
    %13 = vector.load %arg1[%c2, %c0_11, %c0_12] : memref<3x8x32xf32, #tpu.memory_space<vmem>>, vector<1x8x32xf32>
    %14 = vector.shape_cast %13 : vector<1x8x32xf32> to vector<8x32xf32>
    %15 = arith.truncf %14 : vector<8x32xf32> to vector<8x32xbf16>
    %c2_13 = arith.constant 2 : index
    %c0_14 = arith.constant 0 : index
    %c0_15 = arith.constant 0 : index
    %16 = vector.load %arg2[%c2_13, %c0_14, %c0_15] : memref<3x32x256xbf16, #tpu.memory_space<vmem>>, vector<1x32x256xbf16>
    %17 = vector.shape_cast %16 : vector<1x32x256xbf16> to vector<32x256xbf16>
    %cst_16 = arith.constant dense<0.000000e+00> : vector<8x256xf32>
    %18 = tpu.matmul %15, %17, %cst_16 {dimension_numbers = #tpu.dot_dimension_numbers<[1], [0], [0], [1], [0, 0, 1, 1], [], []>} : vector<8x32xbf16>, vector<32x256xbf16>, vector<8x256xf32> -> vector<8x256xf32>
    %19 = arith.addf %12, %18 : vector<8x256xf32>
    %c0_17 = arith.constant 0 : index
    %c0_18 = arith.constant 0 : index
    %20 = vector.load %arg3[%c0_17, %c0_18] : memref<1x256xf32, #tpu.memory_space<vmem>>, vector<1x256xf32>
    %21 = vector.broadcast %20 : vector<1x256xf32> to vector<8x256xf32>
    %22 = arith.addf %19, %21 : vector<8x256xf32>
    %23 = vector.extract_strided_slice %22 {offsets = [0, 0], sizes = [8, 32], strides = [1, 1]} : vector<8x256xf32> to vector<8x32xf32>
    %24 = vector.extract_strided_slice %22 {offsets = [0, 32], sizes = [8, 8], strides = [1, 1]} : vector<8x256xf32> to vector<8x8xf32>
    %25 = vector.extract_strided_slice %22 {offsets = [0, 40], sizes = [8, 8], strides = [1, 1]} : vector<8x256xf32> to vector<8x8xf32>
    %26 = arith.negf %25 : vector<8x8xf32>
    %27 = math.exp %26 : vector<8x8xf32>
    %cst_19 = arith.constant 1.000000e+00 : f32
    %28 = vector.broadcast %cst_19 : f32 to vector<8x8xf32>
    %29 = arith.addf %28, %27 : vector<8x8xf32>
    %30 = arith.divf %28, %29 : vector<8x8xf32>
    %31 = vector.extract_strided_slice %22 {offsets = [0, 48], sizes = [8, 8], strides = [1, 1]} : vector<8x256xf32> to vector<8x8xf32>
    %32 = arith.negf %31 : vector<8x8xf32>
    %33 = math.exp %32 : vector<8x8xf32>
    %cst_20 = arith.constant 1.000000e+00 : f32
    %34 = vector.broadcast %cst_20 : f32 to vector<8x8xf32>
    %35 = arith.addf %34, %33 : vector<8x8xf32>
    %36 = arith.divf %34, %35 : vector<8x8xf32>
    %37 = arith.addf %30, %36 : vector<8x8xf32>
    %38 = vector.extract_strided_slice %22 {offsets = [0, 56], sizes = [8, 8], strides = [1, 1]} : vector<8x256xf32> to vector<8x8xf32>
    %39 = arith.negf %38 : vector<8x8xf32>
    %40 = math.exp %39 : vector<8x8xf32>
    %cst_21 = arith.constant 1.000000e+00 : f32
    %41 = vector.broadcast %cst_21 : f32 to vector<8x8xf32>
    %42 = arith.addf %41, %40 : vector<8x8xf32>
    %43 = arith.divf %41, %42 : vector<8x8xf32>
    %44 = arith.addf %37, %43 : vector<8x8xf32>
    %cst_22 = arith.constant 0.333333343 : f32
    %45 = vector.broadcast %cst_22 : f32 to vector<8x8xf32>
    %46 = arith.mulf %44, %45 : vector<8x8xf32>
    %47 = vector.extract_strided_slice %22 {offsets = [0, 128], sizes = [8, 32], strides = [1, 1]} : vector<8x256xf32> to vector<8x32xf32>
    %48 = arith.mulf %47, %23 : vector<8x32xf32>
    %cst_23 = arith.constant dense<0.000000e+00> : vector<8xf32>
    %49 = vector.multi_reduction <add>, %48, %cst_23 [1] : vector<8x32xf32> to vector<8xf32>
    %50 = vector.shape_cast %49 : vector<8xf32> to vector<8x1xf32>
    %51 = arith.mulf %50, %50 : vector<8x1xf32>
    %52 = vector.extract_strided_slice %22 {offsets = [0, 160], sizes = [8, 32], strides = [1, 1]} : vector<8x256xf32> to vector<8x32xf32>
    %53 = arith.mulf %52, %23 : vector<8x32xf32>
    %cst_24 = arith.constant dense<0.000000e+00> : vector<8xf32>
    %54 = vector.multi_reduction <add>, %53, %cst_24 [1] : vector<8x32xf32> to vector<8xf32>
    %55 = vector.shape_cast %54 : vector<8xf32> to vector<8x1xf32>
    %56 = arith.mulf %55, %55 : vector<8x1xf32>
    %57 = arith.addf %51, %56 : vector<8x1xf32>
    %58 = vector.extract_strided_slice %22 {offsets = [0, 192], sizes = [8, 32], strides = [1, 1]} : vector<8x256xf32> to vector<8x32xf32>
    %59 = arith.mulf %58, %23 : vector<8x32xf32>
    %cst_25 = arith.constant dense<0.000000e+00> : vector<8xf32>
    %60 = vector.multi_reduction <add>, %59, %cst_25 [1] : vector<8x32xf32> to vector<8xf32>
    %61 = vector.shape_cast %60 : vector<8xf32> to vector<8x1xf32>
    %62 = arith.mulf %61, %61 : vector<8x1xf32>
    %63 = arith.addf %57, %62 : vector<8x1xf32>
    %cst_26 = arith.constant 0.000000e+00 : f32
    %64 = vector.broadcast %cst_26 : f32 to vector<8x111xf32>
    %65 = tpu.concatenate %24, %46, %63, %64 in 1 : vector<8x8xf32>, vector<8x8xf32>, vector<8x1xf32>, vector<8x111xf32> -> vector<8x128xf32>
    %c0_27 = arith.constant 0 : index
    %c0_28 = arith.constant 0 : index
    %66 = vector.load %arg4[%c0_27, %c0_28] : memref<8x128xf32, #tpu.memory_space<vmem>>, vector<8x128xf32>
    tpu.vector_store %arg4[%c0_27, %c0_28], %65 {strides = array<i32>} : memref<8x128xf32, #tpu.memory_space<vmem>>, vector<8x128xf32>,
    return
  }
  func.func @transform_0(%arg0: i32) -> (i32, i32, i32) {
    %c0_i32 = arith.constant 0 : i32
    %c0_i32_0 = arith.constant 0 : i32
    %c0_i32_1 = arith.constant 0 : i32
    return %c0_i32, %arg0, %c0_i32_0 : i32, i32, i32
  }
  func.func @transform_1(%arg0: i32) -> (i32, i32, i32) {
    %c0_i32 = arith.constant 0 : i32
    %c0_i32_0 = arith.constant 0 : i32
    %c0_i32_1 = arith.constant 0 : i32
    %c0_i32_2 = arith.constant 0 : i32
    return %c0_i32, %c0_i32_0, %c0_i32_1 : i32, i32, i32
  }
  func.func @transform_2(%arg0: i32) -> (i32, i32) {
    %c0_i32 = arith.constant 0 : i32
    %c0_i32_0 = arith.constant 0 : i32
    %c0_i32_1 = arith.constant 0 : i32
    return %c0_i32, %c0_i32_0 : i32, i32
  }
  func.func @transform_3(%arg0: i32) -> (i32, i32) {
    %c0_i32 = arith.constant 0 : i32
    %c0_i32_0 = arith.constant 0 : i32
    return %arg0, %c0_i32 : i32, i32
  }
}

</mosaic_0001>

<llo_original>
// kernel: simm_forward.1
$region0: #{simm_forward.1}
  #allocation0 [shape = 'u32[]', space=smem, size = 0x4, offset = 0x4, fixed_abs, tag = 'smem constant byte address 0x4 - core index']
  #allocation1 [shape = 'u32[144,128]{1,0:T(1,128)}', space=vmem, size = 0x12000, scoped, tag = 'internal scratch']
  %s0 = inlined_call_operand.hbm [shape: f32[3,8,32], index: 0, kind: input, shape index: {}]
  %s1 = inlined_call_operand.hbm [shape: bf16[3,32,256], index: 1, kind: input, shape index: {}]
  %s2 = inlined_call_operand.vmem [shape: f32[1,256], index: 2, kind: input, shape index: {}]
  %s3 = inlined_call_operand.vmem [shape: f32[8,128], index: 3, kind: output, shape index: {}]
  %s4 = sld [smem:[#allocation0]]
  $region30: #{simm_forward.1} parent=0
    _
  %s6 = ssub.s32 1, %s4
  %s7 = scalar_select 0, %s6, %s4
  $region1: #{simm_forward.1} parent=0
    #allocation2 [shape = 'u8[12288]{0}', space=vmem, size = 0x3000, scoped, tag = 'input window, operand 0, single buffered']
    #allocation3 [shape = 's32[1]{0}', space=sflag, size = 0x4, scoped, tag = 'scoped memory for simm_forward.1']
    #allocation4 [shape = 'u8[49152]{0}', space=vmem, size = 0xc000, scoped, tag = 'input window, operand 1, single buffered']
    #allocation5 [shape = 's32[1]{0}', space=sflag, size = 0x4, scoped, tag = 'scoped memory for simm_forward.1']
    %8 = vsyncpa [#allocation3], 0
    %9 = vsyncpa [#allocation5], 0
    // Predicated region
    $region2: #{simm_forward.1} parent=1 // pred_check
      _
    $region3: #{simm_forward.1} parent=1 // pred_check_branch
      %11 = sbr.rel (0) target = $region5
    $region4: #{simm_forward.1} parent=1 // pred_region
      %s13 = ssub.s32 384, 384
      %14 = vsyncadd [#allocation3], %s13
      %s15 = sshll.u32 [#allocation2], 4
      %s16 = int_to_ptr.vmem [resolvable:$true] %s15
      %21 = dma.hbm_to_vmem [thread:$0]  %s0, 384, %s16, [#allocation3], 128, 128, 8
    $region5: #{simm_forward.1} parent=1 // pred_fallthru
      _
    // Predicated region
    $region6: #{simm_forward.1} parent=1 // pred_check
      _
    $region7: #{simm_forward.1} parent=1 // pred_check_branch
      %23 = sbr.rel (0) target = $region9
    $region8: #{simm_forward.1} parent=1 // pred_region
      %s25 = ssub.s32 1536, 1536
      %26 = vsyncadd [#allocation5], %s25
      %s27 = sshll.u32 [#allocation4], 4
      %s28 = int_to_ptr.vmem [resolvable:$true] %s27
      %33 = dma.hbm_to_vmem [thread:$0]  %s1, 1536, %s28, [#allocation5], 128, 128, 8
    $region9: #{simm_forward.1} parent=1 // pred_fallthru
      _
    // Predicated region
    $region10: #{simm_forward.1} parent=1 // pred_check
      _
    $region11: #{simm_forward.1} parent=1 // pred_check_branch
      %35 = sbr.rel (0) target = $region13
    $region12: #{simm_forward.1} parent=1 // pred_region
      _
    $region13: #{simm_forward.1} parent=1 // pred_fallthru
      _
    // Predicated region
    $region14: #{simm_forward.1} parent=1 // pred_check
      _
    $region15: #{simm_forward.1} parent=1 // pred_check_branch
      %37 = sbr.rel (0) target = $region17
    $region16: #{simm_forward.1} parent=1 // pred_region
      %38 = dma.done [#allocation3], 384
    $region17: #{simm_forward.1} parent=1 // pred_fallthru
      _
    // Predicated region
    $region18: #{simm_forward.1} parent=1 // pred_check
      _
    $region19: #{simm_forward.1} parent=1 // pred_check_branch
      %40 = sbr.rel (0) target = $region21
    $region20: #{simm_forward.1} parent=1 // pred_region
      %41 = dma.done [#allocation5], 1536
    $region21: #{simm_forward.1} parent=1 // pred_fallthru
      _
    %v43 = vld [vmem:[#allocation2] sm:$0xff]
    %v44 = vpack.c.bf16 %v43, %v43
    %v45 = vld [vmem:[#allocation4] sm:$0xff]
    %v46 = vld [vmem:[#allocation4 + $0x8] sm:$0xff]
    %v47 = vld [vmem:[#allocation4 + $0x10] sm:$0xff]
    %v48 = vld [vmem:[#allocation4 + $0x18] sm:$0xff]
    %s49 = scalar_lea.vmem [#allocation2], 8
    %v50 = vld [vmem:[%s49] sm:$0xff]
    %v51 = vpack.c.bf16 %v50, %v50
    %s52 = scalar_lea.vmem [#allocation4], 32
    %v53 = vld [vmem:[%s52] sm:$0xff]
    %v54 = vld [vmem:[%s52 + $0x8] sm:$0xff]
    %v55 = vld [vmem:[%s52 + $0x10] sm:$0xff]
    %v56 = vld [vmem:[%s52 + $0x18] sm:$0xff]
    %v61 = vunpack.c.l.b16 %v53
    %v62 = vunpack.c.h.b16 %v53
    %v63 = vunpack.c.l.b16 %v54
    %v64 = vunpack.c.h.b16 %v54
    %v65 = vunpack.c.l.b16 %v55
    %v66 = vunpack.c.h.b16 %v55
    %v67 = vunpack.c.l.b16 %v56
    %v68 = vunpack.c.h.b16 %v56
    %v69 = vpack.c.b16 %v63, %v61
    %v70 = vpack.c.b16 %v64, %v62
    %v71 = vpack.c.b16 %v67, %v65
    %v72 = vpack.c.b16 %v68, %v66
    %vm77 = vcmask 261120
    %v79 = vsel %vm77, %v51, 0
    %81 = vmatprep.subr.bf16.mxu0 0
    %82 = vmatpush1.bf16.msra.mxu0 0
    %83 = vmatprep.subr.bf16.mxu0 0
    %84 = vmatpush1.bf16.msra.mxu0 0
    %85 = vmatprep.subr.bf16.mxu0 0
    %86 = vmatpush1.bf16.msra.mxu0 0
    %87 = vmatprep.subr.bf16.mxu0 0
    %88 = vmatpush1.bf16.msra.mxu0 0
    %89 = vmatprep.subr.bf16.mxu0 0
    %90 = vmatpush1.bf16.msra.mxu0 0
    %91 = vmatprep.subr.bf16.mxu0 0
    %92 = vmatpush1.bf16.msra.mxu0 0
    %93 = vmatprep.subr.bf16.mxu0 %v72
    %94 = vmatpush1.bf16.msra.mxu0 %v71
    %95 = vmatprep.subr.bf16.mxu0 %v70
    %96 = vmatpush1.bf16.msra.mxu0 %v69
    %97 = vmatprep.subr.bf16.mxu0 0
    %98 = vmatpush2.bf16.msra.mxu0 0
    %99 = vmatprep.subr.bf16.mxu0 0
    %100 = vmatpush2.bf16.msra.mxu0 0
    %101 = vmatprep.subr.bf16.mxu0 0
    %102 = vmatpush2.bf16.msra.mxu0 0
    %103 = vmatprep.subr.bf16.mxu0 0
    %104 = vmatpush2.bf16.msra.mxu0 0
    %105 = vmatprep.subr.bf16.mxu0 0
    %106 = vmatpush2.bf16.msra.mxu0 0
    %107 = vmatprep.subr.bf16.mxu0 0
    %108 = vmatpush2.bf16.msra.mxu0 0
    %109 = vmatprep.subr.bf16.mxu0 0
    %110 = vmatpush2.bf16.msra.mxu0 0
    %111 = vmatprep.subr.bf16.mxu0 0
    %112 = vmatpush2.bf16.msra.mxu0 0
    %113 = vmatprep.mubr.bf16.mxu0 0
    %114 = vmatmul.mubr.bf16.gmra.mxu0 %v79
    %v115 = vpop.f32.mrf.mxu0
    %v116 = vadd.f32 0.0, %v115
    %v117 = vpop.f32.mrf.mxu0
    %v118 = vadd.f32 0.0, %v117
    %v119 = vpop.f32.mrf.mxu0
    %v120 = vpop.f32.mrf.mxu0
    %121 = vdwg.mxu0
    %v126 = vunpack.c.l.b16 %v45
    %v127 = vunpack.c.h.b16 %v45
    %v128 = vunpack.c.l.b16 %v46
    %v129 = vunpack.c.h.b16 %v46
    %v130 = vunpack.c.l.b16 %v47
    %v131 = vunpack.c.h.b16 %v47
    %v132 = vunpack.c.l.b16 %v48
    %v133 = vunpack.c.h.b16 %v48
    %v134 = vpack.c.b16 %v128, %v126
    %v135 = vpack.c.b16 %v129, %v127
    %v136 = vpack.c.b16 %v132, %v130
    %v137 = vpack.c.b16 %v133, %v131
    %v143 = vsel %vm77, %v44, 0
    %145 = vmatprep.subr.bf16.mxu0 0
    %146 = vmatpush1.bf16.msra.mxu0 0
    %147 = vmatprep.subr.bf16.mxu0 0
    %148 = vmatpush1.bf16.msra.mxu0 0
    %149 = vmatprep.subr.bf16.mxu0 0
    %150 = vmatpush1.bf16.msra.mxu0 0
    %151 = vmatprep.subr.bf16.mxu0 0
    %152 = vmatpush1.bf16.msra.mxu0 0
    %153 = vmatprep.subr.bf16.mxu0 0
    %154 = vmatpush1.bf16.msra.mxu0 0
    %155 = vmatprep.subr.bf16.mxu0 0
    %156 = vmatpush1.bf16.msra.mxu0 0
    %157 = vmatprep.subr.bf16.mxu0 %v137
    %158 = vmatpush1.bf16.msra.mxu0 %v136
    %159 = vmatprep.subr.bf16.mxu0 %v135
    %160 = vmatpush1.bf16.msra.mxu0 %v134
    %161 = vmatprep.subr.bf16.mxu0 0
    %162 = vmatpush2.bf16.msra.mxu0 0
    %163 = vmatprep.subr.bf16.mxu0 0
    %164 = vmatpush2.bf16.msra.mxu0 0
    %165 = vmatprep.subr.bf16.mxu0 0
    %166 = vmatpush2.bf16.msra.mxu0 0
    %167 = vmatprep.subr.bf16.mxu0 0
    %168 = vmatpush2.bf16.msra.mxu0 0
    %169 = vmatprep.subr.bf16.mxu0 0
    %170 = vmatpush2.bf16.msra.mxu0 0
    %171 = vmatprep.subr.bf16.mxu0 0
    %172 = vmatpush2.bf16.msra.mxu0 0
    %173 = vmatprep.subr.bf16.mxu0 0
    %174 = vmatpush2.bf16.msra.mxu0 0
    %175 = vmatprep.subr.bf16.mxu0 0
    %176 = vmatpush2.bf16.msra.mxu0 0
    %177 = vmatprep.mubr.bf16.mxu0 0
    %178 = vmatmul.mubr.bf16.gmra.mxu0 %v143
    %v179 = vpop.f32.mrf.mxu0
    %v180 = vadd.f32 %v116, %v179
    %v181 = vpop.f32.mrf.mxu0
    %v182 = vadd.f32 %v118, %v181
    %v183 = vpop.f32.mrf.mxu0
    %v184 = vpop.f32.mrf.mxu0
    %185 = vdwg.mxu0
    %s186 = scalar_lea.vmem [#allocation2], 16
    %v187 = vld [vmem:[%s186] sm:$0xff]
    %v188 = vpack.c.bf16 %v187, %v187
    %s189 = scalar_lea.vmem [#allocation4], 64
    %v190 = vld [vmem:[%s189] sm:$0xff]
    %v191 = vld [vmem:[%s189 + $0x8] sm:$0xff]
    %v192 = vld [vmem:[%s189 + $0x10] sm:$0xff]
    %v193 = vld [vmem:[%s189 + $0x18] sm:$0xff]
    %v198 = vunpack.c.l.b16 %v190
    %v199 = vunpack.c.h.b16 %v190
    %v200 = vunpack.c.l.b16 %v191
    %v201 = vunpack.c.h.b16 %v191
    %v202 = vunpack.c.l.b16 %v192
    %v203 = vunpack.c.h.b16 %v192
    %v204 = vunpack.c.l.b16 %v193
    %v205 = vunpack.c.h.b16 %v193
    %v206 = vpack.c.b16 %v200, %v198
    %v207 = vpack.c.b16 %v201, %v199
    %v208 = vpack.c.b16 %v204, %v202
    %v209 = vpack.c.b16 %v205, %v203
    %v215 = vsel %vm77, %v188, 0
    %217 = vmatprep.subr.bf16.mxu0 0
    %218 = vmatpush1.bf16.msra.mxu0 0
    %219 = vmatprep.subr.bf16.mxu0 0
    %220 = vmatpush1.bf16.msra.mxu0 0
    %221 = vmatprep.subr.bf16.mxu0 0
    %222 = vmatpush1.bf16.msra.mxu0 0
    %223 = vmatprep.subr.bf16.mxu0 0
    %224 = vmatpush1.bf16.msra.mxu0 0
    %225 = vmatprep.subr.bf16.mxu0 0
    %226 = vmatpush1.bf16.msra.mxu0 0
    %227 = vmatprep.subr.bf16.mxu0 0
    %228 = vmatpush1.bf16.msra.mxu0 0
    %229 = vmatprep.subr.bf16.mxu0 %v209
    %230 = vmatpush1.bf16.msra.mxu0 %v208
    %231 = vmatprep.subr.bf16.mxu0 %v207
    %232 = vmatpush1.bf16.msra.mxu0 %v206
    %233 = vmatprep.subr.bf16.mxu0 0
    %234 = vmatpush2.bf16.msra.mxu0 0
    %235 = vmatprep.subr.bf16.mxu0 0
    %236 = vmatpush2.bf16.msra.mxu0 0
    %237 = vmatprep.subr.bf16.mxu0 0
    %238 = vmatpush2.bf16.msra.mxu0 0
    %239 = vmatprep.subr.bf16.mxu0 0
    %240 = vmatpush2.bf16.msra.mxu0 0
    %241 = vmatprep.subr.bf16.mxu0 0
    %242 = vmatpush2.bf16.msra.mxu0 0
    %243 = vmatprep.subr.bf16.mxu0 0
    %244 = vmatpush2.bf16.msra.mxu0 0
    %245 = vmatprep.subr.bf16.mxu0 0
    %246 = vmatpush2.bf16.msra.mxu0 0
    %247 = vmatprep.subr.bf16.mxu0 0
    %248 = vmatpush2.bf16.msra.mxu0 0
    %249 = vmatprep.mubr.bf16.mxu0 0
    %250 = vmatmul.mubr.bf16.gmra.mxu0 %v215
    %v251 = vpop.f32.mrf.mxu0
    %v252 = vadd.f32 0.0, %v251
    %v253 = vpop.f32.mrf.mxu0
    %v254 = vadd.f32 0.0, %v253
    %v255 = vpop.f32.mrf.mxu0
    %v256 = vpop.f32.mrf.mxu0
    %257 = vdwg.mxu0
    %v258 = vadd.f32 %v180, %v252
    %v259 = vadd.f32 %v182, %v254
    %v260 = vld [vmem:[%s2] sm:$0x3]
    %v262 = vlaneseq
    %v263 = vshrl.u32 %v262, 7
    %v264 = vsub.s32 0, %v263
    %v265 = vrot.slane %v260, %v264
    %v266 = vlaneseq
    %v267 = vshrl.u32 %v266, 7
    %v268 = vsub.s32 1, %v267
    %v269 = vrot.slane %v260, %v268
    %v272 = vadd.f32 %v258, %v265
    %v273 = vadd.f32 %v259, %v269
    %v274 = vxor.u32 %v272, 2147483648
    %v275 = vmul.f32 %v274, 1.442695
    %v276 = vpow.pop %v275
    %v277 = vadd.f32 %v276, 1.0
    %v278 = vrcp.pop %v277
    %v279 = vmul.f32 1.0, %v278
    %281 = vrot.lane.b32.xlu0 %v279, 120
    %v282 = vpop.permute.xlu0 %281
    %v284 = vadd.f32 %v279, %v282
    %285 = vrot.lane.b32.xlu0 %v279, 112
    %v286 = vpop.permute.xlu0 %285
    %v288 = vadd.f32 %v284, %v286
    %v289 = vmul.f32 %v288, 0.33333334
    %v290 = vmul.f32 %v273, %v272
    %v291 = vsel %vm77, %v290, 0.0
    %292 = vadd.xlane.f32.xlu0 %v291
    %v293 = vpop.xlane.xlu0 %292
    %v294 = vmul.f32 %v293, %v293
    %296 = vrot.lane.b32.xlu0 %v272, 32
    %v297 = vpop.permute.xlu0 %296
    %v299 = vmul.f32 %v273, %v297
    %301 = vrot.lane.b32.xlu0 %v299, 96
    %v302 = vpop.permute.xlu0 %301
    %v304 = vsel %vm77, %v302, 0.0
    %305 = vadd.xlane.f32.xlu0 %v304
    %v306 = vpop.xlane.xlu0 %305
    %v307 = vmul.f32 %v306, %v306
    %v308 = vadd.f32 %v294, %v307
    %309 = vrot.lane.b32.xlu0 %v272, 64
    %v310 = vpop.permute.xlu0 %309
    %v312 = vmul.f32 %v273, %v310
    %314 = vrot.lane.b32.xlu0 %v312, 64
    %v315 = vpop.permute.xlu0 %314
    %v317 = vsel %vm77, %v315, 0.0
    %318 = vadd.xlane.f32.xlu0 %v317
    %v319 = vpop.xlane.xlu0 %318
    %v320 = vmul.f32 %v319, %v319
    %v321 = vadd.f32 %v308, %v320
    %322 = vrot.lane.b32.xlu0 %v272, 96
    %v323 = vpop.permute.xlu0 %322
    %326 = vrot.lane.b32.xlu0 %v289, 96
    %v327 = vpop.permute.xlu0 %326
    %vm329 = vcmask 64512
    %v330 = vsel %vm329, %v323, %v327
    %vm331 = vcmask 130048
    %v332 = vsel %vm331, %v330, %v321
    %vm333 = vcmask 138240
    %v334 = vsel %vm333, %v332, 0.0
    %335 = vst [vmem:[%s3] sm:$0xff] %v334
    // Predicated region
    $region22: #{simm_forward.1} parent=1 // pred_check
      _
    $region23: #{simm_forward.1} parent=1 // pred_check_branch
      %337 = sbr.rel (0) target = $region25
    $region24: #{simm_forward.1} parent=1 // pred_region
      _
    $region25: #{simm_forward.1} parent=1 // pred_fallthru
      _
    // Predicated region
    $region26: #{simm_forward.1} parent=1 // pred_check
      _
    $region27: #{simm_forward.1} parent=1 // pred_check_branch
      %339 = sbr.rel (0) target = $region29
    $region28: #{simm_forward.1} parent=1 // pred_region
      _
    $region29: #{simm_forward.1} parent=1 // pred_fallthru
      _
    %340 = vsyncpa [#allocation3], 1
    %341 = vsyncpa [#allocation5], 1

</llo_original>
